<compile_context>
chip_gen: v7x
topology: tpu7x:2x2x1
jax: 0.10.0
libtpu: 0.0.40
codegen_flags: <defaults>
</compile_context>

<pallas_src>
import functools
import math

import jax
import jax.numpy as jnp
from jax.experimental import pallas as pl
from jax.experimental.pallas import tpu as pltpu


def _combined_loss_kernel(logits_ref, feats_ref, labels_ref, w_ref, cent_ref,
                          arc_out_ref, cen_out_ref, foc_out_ref,
                          f_norm_sc, m_arc, l_arc, t_arc, m_foc, l_foc, t_foc,
                          *, margin, scale, lambda_c, alpha, gamma, block_c):
    ci = pl.program_id(1)
    nc = pl.num_programs(1)

    labels = labels_ref[...]                      # (TB, 1) int32
    tb = labels.shape[0]
    tc = logits_ref.shape[1]

    cos_m = math.cos(margin)
    sin_m = math.sin(margin)

    # -------- init per batch tile (first class tile) --------
    @pl.when(ci == 0)
    def _init():
        feats = feats_ref[...].astype(jnp.float32)          # (TB, D)
        # Normalized features stay resident for every class tile of this batch tile.
        f_norm_sc[...] = feats * jax.lax.rsqrt(
            jnp.sum(feats * feats, axis=-1, keepdims=True) + 1e-12)

        # Center loss per row: feats already in vregs, centers gathered to (TB, D)
        # in the wrapper.  Output block index is constant across ci, so writing it
        # here is safe (buffer stays resident until the last class step).
        diff = feats - cent_ref[...].astype(jnp.float32)
        cen_out_ref[...] = (lambda_c * 0.5) * jnp.sum(diff * diff,
                                                      axis=-1, keepdims=True)

        neg_inf = jnp.full((tb, 1), -jnp.inf, jnp.float32)
        zeros = jnp.zeros((tb, 1), jnp.float32)
        m_arc[...] = neg_inf
        m_foc[...] = neg_inf
        l_arc[...] = zeros
        t_arc[...] = zeros
        l_foc[...] = zeros
        t_foc[...] = zeros

    # Which classes does this C tile cover?
    class_ids = ci * block_c + jax.lax.broadcasted_iota(jnp.int32, (tb, tc), 1)
    target_mask = class_ids == labels             # (TB, TC) bool

    # -------- ArcFace: cosine tile on the MXU (contract D of both operands) --------
    w_tile = w_ref[...].astype(jnp.float32)       # (TC, D), rows pre-normalized
    cosine = jax.lax.dot_general(
        f_norm_sc[...], w_tile,
        dimension_numbers=(((1,), (1,)), ((), ())),
        preferred_element_type=jnp.float32)       # (TB, TC)
    cosine = jnp.clip(cosine, -1.0 + 1e-7, 1.0 - 1e-7)

    # Target-column margin correction, computed on (TB, 1) only.
    cos_t = jnp.sum(jnp.where(target_mask, cosine, 0.0), axis=-1, keepdims=True)
    phi_t = cos_t * cos_m - jnp.sqrt(jnp.maximum(1.0 - cos_t * cos_t, 0.0)) * sin_m
    delta = scale * (phi_t - cos_t)               # (TB, 1); only applied where mask hits
    arc_logits = scale * cosine + jnp.where(target_mask, delta, 0.0)

    # Online LSE accumulation (ArcFace).
    tile_max = jnp.max(arc_logits, axis=-1, keepdims=True)
    m_new = jnp.maximum(m_arc[...], tile_max)
    l_arc[...] = l_arc[...] * jnp.exp(m_arc[...] - m_new) + jnp.sum(
        jnp.exp(arc_logits - m_new), axis=-1, keepdims=True)
    m_arc[...] = m_new
    t_arc[...] += jnp.sum(jnp.where(target_mask, arc_logits, 0.0),
                          axis=-1, keepdims=True)

    # -------- Focal: fused into the same class-tile pass --------
    logits = logits_ref[...].astype(jnp.float32)  # (TB, TC)
    f_max = jnp.max(logits, axis=-1, keepdims=True)
    mf_new = jnp.maximum(m_foc[...], f_max)
    l_foc[...] = l_foc[...] * jnp.exp(m_foc[...] - mf_new) + jnp.sum(
        jnp.exp(logits - mf_new), axis=-1, keepdims=True)
    m_foc[...] = mf_new
    t_foc[...] += jnp.sum(jnp.where(target_mask, logits, 0.0),
                          axis=-1, keepdims=True)

    # -------- finalize per batch tile (last class tile) --------
    @pl.when(ci == nc - 1)
    def _finalize():
        # ArcFace cross-entropy per row.
        lse_arc = m_arc[...] + jnp.log(l_arc[...])
        arc_out_ref[...] = lse_arc - t_arc[...]

        # Focal loss per row.
        lse_foc = m_foc[...] + jnp.log(l_foc[...])
        logp_t = t_foc[...] - lse_foc
        p_t = jnp.exp(logp_t)
        alpha_t = jnp.where(labels > 0, jnp.float32(alpha),
                            jnp.float32(1.0 - alpha))
        focal_mod = jnp.exp(gamma * jnp.log(jnp.maximum(1.0 - p_t, 1e-12)))
        foc_out_ref[...] = -alpha_t * focal_mod * logp_t


def _pick_tile(n, target, align):
    """Largest multiple of `align` that divides n and is <= target; else n (full)."""
    best = 0
    hi = min(int(target), n)
    for cand in range(align, hi + 1, align):
        if n % cand == 0:
            best = cand
    return best if best > 0 else n


def combined_loss(logits, features, labels, arc_weight, centers, *,
                  margin=0.5, scale=64.0, lambda_c=0.003, alpha=0.75, gamma=2.0,
                  w_arcface=1.0, w_center=0.5, w_focal=1.0,
                  block_b=None, block_c=None):
    """Returns (total_loss, {'arcface':..., 'center':..., 'focal':...})."""
    B, C = logits.shape
    D = features.shape[1]

    labels = labels.reshape(-1).astype(jnp.int32)
    labels_2d = labels.reshape(B, 1)

    # Hoisted, once-per-call parameter work (tiny XLA ops, not per grid step):
    #  * L2-normalize ArcFace class weights, keep native dtype for cheap DMA.
    #  * Row-gather the needed center rows (B*D bytes instead of streaming (C, D)).
    w32 = arc_weight.astype(jnp.float32)
    w_normed = (w32 * jax.lax.rsqrt(
        jnp.sum(w32 * w32, axis=-1, keepdims=True) + 1e-12)).astype(arc_weight.dtype)
    centers_y = jnp.take(centers, labels, axis=0)   # (B, D), native dtype

    TB = _pick_tile(B, block_b if block_b is not None else 128, 8)
    TC = _pick_tile(C, block_c if block_c is not None else 2048, 128)
    nb, nc = B // TB, C // TC

    kernel = functools.partial(
        _combined_loss_kernel,
        margin=float(margin), scale=float(scale), lambda_c=float(lambda_c),
        alpha=float(alpha), gamma=float(gamma), block_c=TC)

    row_shape = jax.ShapeDtypeStruct((B, 1), jnp.float32)
    arc_rows, cen_rows, foc_rows = pl.pallas_call(
        kernel,
        grid=(nb, nc),
        in_specs=[
            pl.BlockSpec((TB, TC), lambda bi, ci: (bi, ci)),   # logits (streamed)
            pl.BlockSpec((TB, D), lambda bi, ci: (bi, 0)),     # features (resident/bi)
            pl.BlockSpec((TB, 1), lambda bi, ci: (bi, 0)),     # labels
            pl.BlockSpec((TC, D), lambda bi, ci: (ci, 0)),     # normalized arc weights
            pl.BlockSpec((TB, D), lambda bi, ci: (bi, 0)),     # gathered centers
        ],
        out_specs=(
            pl.BlockSpec((TB, 1), lambda bi, ci: (bi, 0)),     # arcface per-row
            pl.BlockSpec((TB, 1), lambda bi, ci: (bi, 0)),     # center per-row
            pl.BlockSpec((TB, 1), lambda bi, ci: (bi, 0)),     # focal per-row
        ),
        out_shape=(row_shape, row_shape, row_shape),
        scratch_shapes=[
            pltpu.VMEM((TB, D), jnp.float32),   # normalized features
            pltpu.VMEM((TB, 1), jnp.float32),   # m_arc (running max)
            pltpu.VMEM((TB, 1), jnp.float32),   # l_arc (running sum)
            pltpu.VMEM((TB, 1), jnp.float32),   # t_arc (target arc logit)
            pltpu.VMEM((TB, 1), jnp.float32),   # m_foc
            pltpu.VMEM((TB, 1), jnp.float32),   # l_foc
            pltpu.VMEM((TB, 1), jnp.float32),   # t_foc (target logit)
        ],
        compiler_params=pltpu.CompilerParams(
            dimension_semantics=("parallel", "arbitrary"),
            vmem_limit_bytes=32 * 1024 * 1024),
    )(logits, features, labels_2d, w_normed, centers_y)

    inv_b = 1.0 / float(B)
    arc_l = jnp.sum(arc_rows) * inv_b
    cen_l = jnp.sum(cen_rows) * inv_b
    foc_l = jnp.sum(foc_rows) * inv_b
    total = w_arcface * arc_l + w_center * cen_l + w_focal * foc_l
    components = {"arcface": arc_l, "center": cen_l, "focal": foc_l}
    return total, components


def _reference(logits, features, labels, arc_weight, centers, *, margin, scale,
               lambda_c, alpha, gamma, w_arcface, w_center, w_focal):
    """Pure-jnp reference of the same forward math (highest matmul precision)."""
    logits = logits.astype(jnp.float32)
    feats = features.astype(jnp.float32)
    w = arc_weight.astype(jnp.float32)
    cent = centers.astype(jnp.float32)
    labels = labels.astype(jnp.int32)
    B, C = logits.shape
    onehot = jax.nn.one_hot(labels, C, dtype=jnp.float32)

    f_n = feats * jax.lax.rsqrt(jnp.sum(feats * feats, -1, keepdims=True) + 1e-12)
    w_n = w * jax.lax.rsqrt(jnp.sum(w * w, -1, keepdims=True) + 1e-12)
    cosine = jnp.dot(f_n, w_n.T, precision=jax.lax.Precision.HIGHEST)
    cosine = jnp.clip(cosine, -1.0 + 1e-7, 1.0 - 1e-7)
    sine = jnp.sqrt(1.0 - cosine * cosine)
    phi = cosine * math.cos(margin) - sine * math.sin(margin)
    arc_logits = scale * jnp.where(onehot > 0.5, phi, cosine)
    arc_logp = jax.nn.log_softmax(arc_logits, axis=-1)
    arcface = -jnp.mean(jnp.sum(onehot * arc_logp, axis=-1))

    diff = feats - cent[labels]
    center = lambda_c * 0.5 * jnp.mean(jnp.sum(diff * diff, axis=-1))

    logp = jax.nn.log_softmax(logits, axis=-1)
    logp_t = jnp.sum(onehot * logp, axis=-1)
    p_t = jnp.exp(logp_t)
    alpha_t = jnp.where(labels > 0, alpha, 1.0 - alpha)
    focal_mod = jnp.exp(gamma * jnp.log(jnp.maximum(1.0 - p_t, 1e-12)))
    focal = jnp.mean(-alpha_t * focal_mod * logp_t)

    total = w_arcface * arcface + w_center * center + w_focal * focal
    return total, {"arcface": arcface, "center": center, "focal": focal}


if __name__ == "__main__":
    # Small deterministic problem that still exercises a (2, 2) grid.
    B, C, D = 16, 256, 128   # batch, num_classes, feat_dim

    key = jax.random.PRNGKey(0)
    k_logits, k_feats, k_labels, k_w, k_centers = jax.random.split(key, 5)

    logits = jax.random.normal(k_logits, (B, C), dtype=jnp.float32)
    features = jax.random.normal(k_feats, (B, D), dtype=jnp.float32)
    labels = jax.random.randint(k_labels, (B,), 0, C, dtype=jnp.int32)
    arc_weight = jax.random.normal(k_w, (C, D), dtype=jnp.float32) * 0.1
    centers = jax.random.normal(k_centers, (C, D), dtype=jnp.float32) * 0.1

    cfg = dict(margin=0.5, scale=64.0, lambda_c=0.003, alpha=0.75, gamma=2.0,
               w_arcface=1.0, w_center=0.5, w_focal=1.0)

    total, comps = combined_loss(
        logits, features, labels, arc_weight, centers,
        block_b=8, block_c=128, **cfg)             # grid = (2 batch tiles, 2 class tiles)

    total = jax.block_until_ready(total)
    comps = {k: float(jax.block_until_ready(v)) for k, v in comps.items()}

    # Sanity check against a pure-jnp reference (loose tol: MXU f32 accumulation order).
    ref_total, ref_comps = _reference(logits, features, labels, arc_weight, centers, **cfg)
    for name in ("arcface", "center", "focal"):
        got = comps[name]
        ref = float(ref_comps[name])
        if not abs(got - ref) <= 2e-2 * (1.0 + abs(ref)):
            raise AssertionError(f"{name}: kernel={got} reference={ref}")

    print("KERNEL_OK")
</pallas_src>

<mosaic_0001>
module attributes {stable_mosaic.version = 11 : i64} {
  func.func @_combined_loss_kernel(%arg0: i32, %arg1: i32, %arg2: memref<8x128xf32, #tpu.memory_space<vmem>>, %arg3: memref<8x128xf32, #tpu.memory_space<vmem>>, %arg4: memref<8x1xi32, #tpu.memory_space<vmem>>, %arg5: memref<128x128xf32, #tpu.memory_space<vmem>>, %arg6: memref<8x128xf32, #tpu.memory_space<vmem>>, %arg7: memref<8x1xf32, #tpu.memory_space<vmem>>, %arg8: memref<8x1xf32, #tpu.memory_space<vmem>>, %arg9: memref<8x1xf32, #tpu.memory_space<vmem>>, %arg10: memref<8x128xf32, #tpu.memory_space<vmem>>, %arg11: memref<8x1xf32, #tpu.memory_space<vmem>>, %arg12: memref<8x1xf32, #tpu.memory_space<vmem>>, %arg13: memref<8x1xf32, #tpu.memory_space<vmem>>, %arg14: memref<8x1xf32, #tpu.memory_space<vmem>>, %arg15: memref<8x1xf32, #tpu.memory_space<vmem>>, %arg16: memref<8x1xf32, #tpu.memory_space<vmem>>) attributes {dimension_semantics = [#tpu.dimension_semantics<parallel>, #tpu.dimension_semantics<arbitrary>], iteration_bounds = array<i64: 2, 2>, scalar_prefetch = 0 : i64, scratch_operands = 7 : i64, tpu.core_type = #tpu.core_type<tc>, window_params = [{transform_indices = @transform_0, window_bounds = array<i64: 8, 128>}, {transform_indices = @transform_1, window_bounds = array<i64: 8, 128>}, {transform_indices = @transform_2, window_bounds = array<i64: 8, 1>}, {transform_indices = @transform_3, window_bounds = array<i64: 128, 128>}, {transform_indices = @transform_4, window_bounds = array<i64: 8, 128>}, {transform_indices = @transform_5, window_bounds = array<i64: 8, 1>}, {transform_indices = @transform_6, window_bounds = array<i64: 8, 1>}, {transform_indices = @transform_7, window_bounds = array<i64: 8, 1>}]} {
    %c0 = arith.constant 0 : index
    %c0_0 = arith.constant 0 : index
    %0 = vector.load %arg4[%c0, %c0_0] : memref<8x1xi32, #tpu.memory_space<vmem>>, vector<8x1xi32>
    %c0_i32 = arith.constant 0 : i32
    %1 = arith.cmpi eq, %arg1, %c0_i32 : i32
    %2 = arith.extui %1 : i1 to i32
    %c0_i32_1 = arith.constant 0 : i32
    %3 = arith.cmpi ne, %2, %c0_i32_1 : i32
    scf.if %3 {
      %c0_56 = arith.constant 0 : index
      %c0_57 = arith.constant 0 : index
      %94 = vector.load %arg3[%c0_56, %c0_57] : memref<8x128xf32, #tpu.memory_space<vmem>>, vector<8x128xf32>
      %95 = arith.mulf %94, %94 : vector<8x128xf32>
      %cst_58 = arith.constant dense<0.000000e+00> : vector<8xf32>
      %96 = vector.multi_reduction <add>, %95, %cst_58 [1] : vector<8x128xf32> to vector<8xf32>
      %97 = vector.shape_cast %96 : vector<8xf32> to vector<8x1xf32>
      %cst_59 = arith.constant 9.99999996E-13 : f32
      %98 = vector.broadcast %cst_59 : f32 to vector<8x1xf32>
      %99 = arith.addf %97, %98 : vector<8x1xf32>
      %100 = math.rsqrt %99 : vector<8x1xf32>
      %101 = vector.broadcast %100 : vector<8x1xf32> to vector<8x128xf32>
      %102 = arith.mulf %94, %101 : vector<8x128xf32>
      %c0_60 = arith.constant 0 : index
      %c0_61 = arith.constant 0 : index
      %103 = vector.load %arg10[%c0_60, %c0_61] : memref<8x128xf32, #tpu.memory_space<vmem>>, vector<8x128xf32>
      tpu.vector_store %arg10[%c0_60, %c0_61], %102 {strides = array<i32>} : memref<8x128xf32, #tpu.memory_space<vmem>>, vector<8x128xf32>,
      %c0_62 = arith.constant 0 : index
      %c0_63 = arith.constant 0 : index
      %104 = vector.load %arg6[%c0_62, %c0_63] : memref<8x128xf32, #tpu.memory_space<vmem>>, vector<8x128xf32>
      %105 = arith.subf %94, %104 : vector<8x128xf32>
      %106 = arith.mulf %105, %105 : vector<8x128xf32>
      %cst_64 = arith.constant dense<0.000000e+00> : vector<8xf32>
      %107 = vector.multi_reduction <add>, %106, %cst_64 [1] : vector<8x128xf32> to vector<8xf32>
      %108 = vector.shape_cast %107 : vector<8xf32> to vector<8x1xf32>
      %cst_65 = arith.constant 1.500000e-03 : f32
      %109 = vector.broadcast %cst_65 : f32 to vector<8x1xf32>
      %110 = arith.mulf %109, %108 : vector<8x1xf32>
      %c0_66 = arith.constant 0 : index
      %c0_67 = arith.constant 0 : index
      %111 = vector.load %arg8[%c0_66, %c0_67] : memref<8x1xf32, #tpu.memory_space<vmem>>, vector<8x1xf32>
      tpu.vector_store %arg8[%c0_66, %c0_67], %110 {strides = array<i32>} : memref<8x1xf32, #tpu.memory_space<vmem>>, vector<8x1xf32>,
      %cst_68 = arith.constant 0xFF800000 : f32
      %112 = vector.broadcast %cst_68 : f32 to vector<8x1xf32>
      %cst_69 = arith.constant 0.000000e+00 : f32
      %113 = vector.broadcast %cst_69 : f32 to vector<8x1xf32>
      %c0_70 = arith.constant 0 : index
      %c0_71 = arith.constant 0 : index
      %114 = vector.load %arg11[%c0_70, %c0_71] : memref<8x1xf32, #tpu.memory_space<vmem>>, vector<8x1xf32>
      tpu.vector_store %arg11[%c0_70, %c0_71], %112 {strides = array<i32>} : memref<8x1xf32, #tpu.memory_space<vmem>>, vector<8x1xf32>,
      %c0_72 = arith.constant 0 : index
      %c0_73 = arith.constant 0 : index
      %115 = vector.load %arg14[%c0_72, %c0_73] : memref<8x1xf32, #tpu.memory_space<vmem>>, vector<8x1xf32>
      tpu.vector_store %arg14[%c0_72, %c0_73], %112 {strides = array<i32>} : memref<8x1xf32, #tpu.memory_space<vmem>>, vector<8x1xf32>,
      %c0_74 = arith.constant 0 : index
      %c0_75 = arith.constant 0 : index
      %116 = vector.load %arg12[%c0_74, %c0_75] : memref<8x1xf32, #tpu.memory_space<vmem>>, vector<8x1xf32>
      tpu.vector_store %arg12[%c0_74, %c0_75], %113 {strides = array<i32>} : memref<8x1xf32, #tpu.memory_space<vmem>>, vector<8x1xf32>,
      %c0_76 = arith.constant 0 : index
      %c0_77 = arith.constant 0 : index
      %117 = vector.load %arg13[%c0_76, %c0_77] : memref<8x1xf32, #tpu.memory_space<vmem>>, vector<8x1xf32>
      tpu.vector_store %arg13[%c0_76, %c0_77], %113 {strides = array<i32>} : memref<8x1xf32, #tpu.memory_space<vmem>>, vector<8x1xf32>,
      %c0_78 = arith.constant 0 : index
      %c0_79 = arith.constant 0 : index
      %118 = vector.load %arg15[%c0_78, %c0_79] : memref<8x1xf32, #tpu.memory_space<vmem>>, vector<8x1xf32>
      tpu.vector_store %arg15[%c0_78, %c0_79], %113 {strides = array<i32>} : memref<8x1xf32, #tpu.memory_space<vmem>>, vector<8x1xf32>,
      %c0_80 = arith.constant 0 : index
      %c0_81 = arith.constant 0 : index
      %119 = vector.load %arg16[%c0_80, %c0_81] : memref<8x1xf32, #tpu.memory_space<vmem>>, vector<8x1xf32>
      tpu.vector_store %arg16[%c0_80, %c0_81], %113 {strides = array<i32>} : memref<8x1xf32, #tpu.memory_space<vmem>>, vector<8x1xf32>,
    } else {
    }
    %c128_i32 = arith.constant 128 : i32
    %4 = arith.muli %arg1, %c128_i32 : i32
    %5 = tpu.iota {dimensions = array<i32: 1>} : vector<8x128xi32>
    %6 = vector.broadcast %4 : i32 to vector<8x128xi32>
    %7 = arith.addi %6, %5 : vector<8x128xi32>
    %8 = vector.broadcast %0 : vector<8x1xi32> to vector<8x128xi32>
    %9 = arith.cmpi eq, %7, %8 : vector<8x128xi32>
    %c0_2 = arith.constant 0 : index
    %c0_3 = arith.constant 0 : index
    %10 = vector.load %arg5[%c0_2, %c0_3] : memref<128x128xf32, #tpu.memory_space<vmem>>, vector<128x128xf32>
    %c0_4 = arith.constant 0 : index
    %c0_5 = arith.constant 0 : index
    %11 = vector.load %arg10[%c0_4, %c0_5] : memref<8x128xf32, #tpu.memory_space<vmem>>, vector<8x128xf32>
    %cst = arith.constant dense<0.000000e+00> : vector<8x128xf32>
    %12 = tpu.matmul %11, %10, %cst {dimension_numbers = #tpu.dot_dimension_numbers<[1], [1], [0], [0], [0, 0, 1, 0], [], []>} : vector<8x128xf32>, vector<128x128xf32>, vector<8x128xf32> -> vector<8x128xf32>
    %cst_6 = arith.constant -0.99999988 : f32
    %cst_7 = arith.constant 0.99999988 : f32
    %13 = vector.broadcast %cst_6 : f32 to vector<8x128xf32>
    %14 = arith.maximumf %13, %12 : vector<8x128xf32>
    %15 = vector.broadcast %cst_7 : f32 to vector<8x128xf32>
    %16 = arith.minimumf %15, %14 : vector<8x128xf32>
    %cst_8 = arith.constant 0.000000e+00 : f32
    %17 = vector.broadcast %cst_8 : f32 to vector<8x128xf32>
    %18 = arith.select %9, %16, %17 : vector<8x128xi1>, vector<8x128xf32>
    %cst_9 = arith.constant dense<0.000000e+00> : vector<8xf32>
    %19 = vector.multi_reduction <add>, %18, %cst_9 [1] : vector<8x128xf32> to vector<8xf32>
    %20 = vector.shape_cast %19 : vector<8xf32> to vector<8x1xf32>
    %cst_10 = arith.constant 0.87758255 : f32
    %21 = vector.broadcast %cst_10 : f32 to vector<8x1xf32>
    %22 = arith.mulf %20, %21 : vector<8x1xf32>
    %23 = arith.mulf %20, %20 : vector<8x1xf32>
    %cst_11 = arith.constant 1.000000e+00 : f32
    %24 = vector.broadcast %cst_11 : f32 to vector<8x1xf32>
    %25 = arith.subf %24, %23 : vector<8x1xf32>
    %cst_12 = arith.constant 0.000000e+00 : f32
    %26 = vector.broadcast %cst_12 : f32 to vector<8x1xf32>
    %27 = arith.maximumf %25, %26 : vector<8x1xf32>
    %28 = math.sqrt %27 : vector<8x1xf32>
    %cst_13 = arith.constant 0.47942555 : f32
    %29 = vector.broadcast %cst_13 : f32 to vector<8x1xf32>
    %30 = arith.mulf %28, %29 : vector<8x1xf32>
    %31 = arith.subf %22, %30 : vector<8x1xf32>
    %32 = arith.subf %31, %20 : vector<8x1xf32>
    %cst_14 = arith.constant 6.400000e+01 : f32
    %33 = vector.broadcast %cst_14 : f32 to vector<8x1xf32>
    %34 = arith.mulf %33, %32 : vector<8x1xf32>
    %cst_15 = arith.constant 6.400000e+01 : f32
    %35 = vector.broadcast %cst_15 : f32 to vector<8x128xf32>
    %36 = arith.mulf %35, %16 : vector<8x128xf32>
    %cst_16 = arith.constant 0.000000e+00 : f32
    %37 = vector.shape_cast %34 : vector<8x1xf32> to vector<8x1xf32>
    %38 = vector.broadcast %37 : vector<8x1xf32> to vector<8x128xf32>
    %39 = vector.broadcast %cst_16 : f32 to vector<8x128xf32>
    %40 = arith.select %9, %38, %39 : vector<8x128xi1>, vector<8x128xf32>
    %41 = arith.addf %36, %40 : vector<8x128xf32>
    %cst_17 = arith.constant dense<0xFF800000> : vector<8xf32>
    %42 = vector.multi_reduction <maximumf>, %41, %cst_17 [1] : vector<8x128xf32> to vector<8xf32>
    %43 = vector.shape_cast %42 : vector<8xf32> to vector<8x1xf32>
    %c0_18 = arith.constant 0 : index
    %c0_19 = arith.constant 0 : index
    %44 = vector.load %arg11[%c0_18, %c0_19] : memref<8x1xf32, #tpu.memory_space<vmem>>, vector<8x1xf32>
    %45 = arith.maximumf %44, %43 : vector<8x1xf32>
    %c0_20 = arith.constant 0 : index
    %c0_21 = arith.constant 0 : index
    %46 = vector.load %arg12[%c0_20, %c0_21] : memref<8x1xf32, #tpu.memory_space<vmem>>, vector<8x1xf32>
    %c0_22 = arith.constant 0 : index
    %c0_23 = arith.constant 0 : index
    %47 = vector.load %arg11[%c0_22, %c0_23] : memref<8x1xf32, #tpu.memory_space<vmem>>, vector<8x1xf32>
    %48 = arith.subf %47, %45 : vector<8x1xf32>
    %49 = math.exp %48 : vector<8x1xf32>
    %50 = arith.mulf %46, %49 : vector<8x1xf32>
    %51 = vector.broadcast %45 : vector<8x1xf32> to vector<8x128xf32>
    %52 = arith.subf %41, %51 : vector<8x128xf32>
    %53 = math.exp %52 : vector<8x128xf32>
    %cst_24 = arith.constant dense<0.000000e+00> : vector<8xf32>
    %54 = vector.multi_reduction <add>, %53, %cst_24 [1] : vector<8x128xf32> to vector<8xf32>
    %55 = vector.shape_cast %54 : vector<8xf32> to vector<8x1xf32>
    %56 = arith.addf %50, %55 : vector<8x1xf32>
    %c0_25 = arith.constant 0 : index
    %c0_26 = arith.constant 0 : index
    %57 = vector.load %arg12[%c0_25, %c0_26] : memref<8x1xf32, #tpu.memory_space<vmem>>, vector<8x1xf32>
    tpu.vector_store %arg12[%c0_25, %c0_26], %56 {strides = array<i32>} : memref<8x1xf32, #tpu.memory_space<vmem>>, vector<8x1xf32>,
    %c0_27 = arith.constant 0 : index
    %c0_28 = arith.constant 0 : index
    %58 = vector.load %arg11[%c0_27, %c0_28] : memref<8x1xf32, #tpu.memory_space<vmem>>, vector<8x1xf32>
    tpu.vector_store %arg11[%c0_27, %c0_28], %45 {strides = array<i32>} : memref<8x1xf32, #tpu.memory_space<vmem>>, vector<8x1xf32>,
    %c0_29 = arith.constant 0 : index
    %c0_30 = arith.constant 0 : index
    %59 = vector.load %arg13[%c0_29, %c0_30] : memref<8x1xf32, #tpu.memory_space<vmem>>, vector<8x1xf32>
    %cst_31 = arith.constant 0.000000e+00 : f32
    %60 = vector.broadcast %cst_31 : f32 to vector<8x128xf32>
    %61 = arith.select %9, %41, %60 : vector<8x128xi1>, vector<8x128xf32>
    %cst_32 = arith.constant dense<0.000000e+00> : vector<8xf32>
    %62 = vector.multi_reduction <add>, %61, %cst_32 [1] : vector<8x128xf32> to vector<8xf32>
    %63 = vector.shape_cast %62 : vector<8xf32> to vector<8x1xf32>
    %64 = arith.addf %59, %63 : vector<8x1xf32>
    %c0_33 = arith.constant 0 : index
    %c0_34 = arith.constant 0 : index
    %65 = vector.load %arg13[%c0_33, %c0_34] : memref<8x1xf32, #tpu.memory_space<vmem>>, vector<8x1xf32>
    tpu.vector_store %arg13[%c0_33, %c0_34], %64 {strides = array<i32>} : memref<8x1xf32, #tpu.memory_space<vmem>>, vector<8x1xf32>,
    %c0_35 = arith.constant 0 : index
    %c0_36 = arith.constant 0 : index
    %66 = vector.load %arg2[%c0_35, %c0_36] : memref<8x128xf32, #tpu.memory_space<vmem>>, vector<8x128xf32>
    %cst_37 = arith.constant dense<0xFF800000> : vector<8xf32>
    %67 = vector.multi_reduction <maximumf>, %66, %cst_37 [1] : vector<8x128xf32> to vector<8xf32>
    %68 = vector.shape_cast %67 : vector<8xf32> to vector<8x1xf32>
    %c0_38 = arith.constant 0 : index
    %c0_39 = arith.constant 0 : index
    %69 = vector.load %arg14[%c0_38, %c0_39] : memref<8x1xf32, #tpu.memory_space<vmem>>, vector<8x1xf32>
    %70 = arith.maximumf %69, %68 : vector<8x1xf32>
    %c0_40 = arith.constant 0 : index
    %c0_41 = arith.constant 0 : index
    %71 = vector.load %arg15[%c0_40, %c0_41] : memref<8x1xf32, #tpu.memory_space<vmem>>, vector<8x1xf32>
    %c0_42 = arith.constant 0 : index
    %c0_43 = arith.constant 0 : index
    %72 = vector.load %arg14[%c0_42, %c0_43] : memref<8x1xf32, #tpu.memory_space<vmem>>, vector<8x1xf32>
    %73 = arith.subf %72, %70 : vector<8x1xf32>
    %74 = math.exp %73 : vector<8x1xf32>
    %75 = arith.mulf %71, %74 : vector<8x1xf32>
    %76 = vector.broadcast %70 : vector<8x1xf32> to vector<8x128xf32>
    %77 = arith.subf %66, %76 : vector<8x128xf32>
    %78 = math.exp %77 : vector<8x128xf32>
    %cst_44 = arith.constant dense<0.000000e+00> : vector<8xf32>
    %79 = vector.multi_reduction <add>, %78, %cst_44 [1] : vector<8x128xf32> to vector<8xf32>
    %80 = vector.shape_cast %79 : vector<8xf32> to vector<8x1xf32>
    %81 = arith.addf %75, %80 : vector<8x1xf32>
    %c0_45 = arith.constant 0 : index
    %c0_46 = arith.constant 0 : index
    %82 = vector.load %arg15[%c0_45, %c0_46] : memref<8x1xf32, #tpu.memory_space<vmem>>, vector<8x1xf32>
    tpu.vector_store %arg15[%c0_45, %c0_46], %81 {strides = array<i32>} : memref<8x1xf32, #tpu.memory_space<vmem>>, vector<8x1xf32>,
    %c0_47 = arith.constant 0 : index
    %c0_48 = arith.constant 0 : index
    %83 = vector.load %arg14[%c0_47, %c0_48] : memref<8x1xf32, #tpu.memory_space<vmem>>, vector<8x1xf32>
    tpu.vector_store %arg14[%c0_47, %c0_48], %70 {strides = array<i32>} : memref<8x1xf32, #tpu.memory_space<vmem>>, vector<8x1xf32>,
    %c0_49 = arith.constant 0 : index
    %c0_50 = arith.constant 0 : index
    %84 = vector.load %arg16[%c0_49, %c0_50] : memref<8x1xf32, #tpu.memory_space<vmem>>, vector<8x1xf32>
    %cst_51 = arith.constant 0.000000e+00 : f32
    %85 = vector.broadcast %cst_51 : f32 to vector<8x128xf32>
    %86 = arith.select %9, %66, %85 : vector<8x128xi1>, vector<8x128xf32>
    %cst_52 = arith.constant dense<0.000000e+00> : vector<8xf32>
    %87 = vector.multi_reduction <add>, %86, %cst_52 [1] : vector<8x128xf32> to vector<8xf32>
    %88 = vector.shape_cast %87 : vector<8xf32> to vector<8x1xf32>
    %89 = arith.addf %84, %88 : vector<8x1xf32>
    %c0_53 = arith.constant 0 : index
    %c0_54 = arith.constant 0 : index
    %90 = vector.load %arg16[%c0_53, %c0_54] : memref<8x1xf32, #tpu.memory_space<vmem>>, vector<8x1xf32>
    tpu.vector_store %arg16[%c0_53, %c0_54], %89 {strides = array<i32>} : memref<8x1xf32, #tpu.memory_space<vmem>>, vector<8x1xf32>,
    %c1_i32 = arith.constant 1 : i32
    %91 = arith.cmpi eq, %arg1, %c1_i32 : i32
    %92 = arith.extui %91 : i1 to i32
    %c0_i32_55 = arith.constant 0 : i32
    %93 = arith.cmpi ne, %92, %c0_i32_55 : i32
    scf.if %93 {
      %c0_56 = arith.constant 0 : index
      %c0_57 = arith.constant 0 : index
      %94 = vector.load %arg11[%c0_56, %c0_57] : memref<8x1xf32, #tpu.memory_space<vmem>>, vector<8x1xf32>
      %c0_58 = arith.constant 0 : index
      %c0_59 = arith.constant 0 : index
      %95 = vector.load %arg12[%c0_58, %c0_59] : memref<8x1xf32, #tpu.memory_space<vmem>>, vector<8x1xf32>
      %96 = math.log %95 : vector<8x1xf32>
      %97 = arith.addf %94, %96 : vector<8x1xf32>
      %c0_60 = arith.constant 0 : index
      %c0_61 = arith.constant 0 : index
      %98 = vector.load %arg13[%c0_60, %c0_61] : memref<8x1xf32, #tpu.memory_space<vmem>>, vector<8x1xf32>
      %99 = arith.subf %97, %98 : vector<8x1xf32>
      %c0_62 = arith.constant 0 : index
      %c0_63 = arith.constant 0 : index
      %100 = vector.load %arg7[%c0_62, %c0_63] : memref<8x1xf32, #tpu.memory_space<vmem>>, vector<8x1xf32>
      tpu.vector_store %arg7[%c0_62, %c0_63], %99 {strides = array<i32>} : memref<8x1xf32, #tpu.memory_space<vmem>>, vector<8x1xf32>,
      %c0_64 = arith.constant 0 : index
      %c0_65 = arith.constant 0 : index
      %101 = vector.load %arg14[%c0_64, %c0_65] : memref<8x1xf32, #tpu.memory_space<vmem>>, vector<8x1xf32>
      %c0_66 = arith.constant 0 : index
      %c0_67 = arith.constant 0 : index
      %102 = vector.load %arg15[%c0_66, %c0_67] : memref<8x1xf32, #tpu.memory_space<vmem>>, vector<8x1xf32>
      %103 = math.log %102 : vector<8x1xf32>
      %104 = arith.addf %101, %103 : vector<8x1xf32>
      %c0_68 = arith.constant 0 : index
      %c0_69 = arith.constant 0 : index
      %105 = vector.load %arg16[%c0_68, %c0_69] : memref<8x1xf32, #tpu.memory_space<vmem>>, vector<8x1xf32>
      %106 = arith.subf %105, %104 : vector<8x1xf32>
      %107 = math.exp %106 : vector<8x1xf32>
      %c0_i32_70 = arith.constant 0 : i32
      %108 = vector.broadcast %c0_i32_70 : i32 to vector<8x1xi32>
      %109 = arith.cmpi sgt, %0, %108 : vector<8x1xi32>
      %cst_71 = arith.constant 7.500000e-01 : f32
      %cst_72 = arith.constant 2.500000e-01 : f32
      %110 = vector.broadcast %cst_71 : f32 to vector<8x1xf32>
      %111 = vector.broadcast %cst_72 : f32 to vector<8x1xf32>
      %112 = arith.select %109, %110, %111 : vector<8x1xi1>, vector<8x1xf32>
      %cst_73 = arith.constant 1.000000e+00 : f32
      %113 = vector.broadcast %cst_73 : f32 to vector<8x1xf32>
      %114 = arith.subf %113, %107 : vector<8x1xf32>
      %cst_74 = arith.constant 9.99999996E-13 : f32
      %115 = vector.broadcast %cst_74 : f32 to vector<8x1xf32>
      %116 = arith.maximumf %114, %115 : vector<8x1xf32>
      %117 = math.log %116 : vector<8x1xf32>
      %cst_75 = arith.constant 2.000000e+00 : f32
      %118 = vector.broadcast %cst_75 : f32 to vector<8x1xf32>
      %119 = arith.mulf %118, %117 : vector<8x1xf32>
      %120 = math.exp %119 : vector<8x1xf32>
      %cst_76 = arith.constant 0.000000e+00 : f32
      %121 = vector.broadcast %cst_76 : f32 to vector<8x1xf32>
      %122 = arith.subf %121, %112 : vector<8x1xf32>
      %123 = arith.mulf %122, %120 : vector<8x1xf32>
      %124 = arith.mulf %123, %106 : vector<8x1xf32>
      %c0_77 = arith.constant 0 : index
      %c0_78 = arith.constant 0 : index
      %125 = vector.load %arg9[%c0_77, %c0_78] : memref<8x1xf32, #tpu.memory_space<vmem>>, vector<8x1xf32>
      tpu.vector_store %arg9[%c0_77, %c0_78], %124 {strides = array<i32>} : memref<8x1xf32, #tpu.memory_space<vmem>>, vector<8x1xf32>,
    } else {
    }
    return
  }
  func.func @transform_0(%arg0: i32, %arg1: i32) -> (i32, i32) {
    %c0_i32 = arith.constant 0 : i32
    return %arg0, %arg1 : i32, i32
  }
  func.func @transform_1(%arg0: i32, %arg1: i32) -> (i32, i32) {
    %c0_i32 = arith.constant 0 : i32
    %c0_i32_0 = arith.constant 0 : i32
    return %arg0, %c0_i32 : i32, i32
  }
  func.func @transform_2(%arg0: i32, %arg1: i32) -> (i32, i32) {
    %c0_i32 = arith.constant 0 : i32
    %c0_i32_0 = arith.constant 0 : i32
    return %arg0, %c0_i32 : i32, i32
  }
  func.func @transform_3(%arg0: i32, %arg1: i32) -> (i32, i32) {
    %c0_i32 = arith.constant 0 : i32
    %c0_i32_0 = arith.constant 0 : i32
    return %arg1, %c0_i32 : i32, i32
  }
  func.func @transform_4(%arg0: i32, %arg1: i32) -> (i32, i32) {
    %c0_i32 = arith.constant 0 : i32
    %c0_i32_0 = arith.constant 0 : i32
    return %arg0, %c0_i32 : i32, i32
  }
  func.func @transform_5(%arg0: i32, %arg1: i32) -> (i32, i32) {
    %c0_i32 = arith.constant 0 : i32
    %c0_i32_0 = arith.constant 0 : i32
    return %arg0, %c0_i32 : i32, i32
  }
  func.func @transform_6(%arg0: i32, %arg1: i32) -> (i32, i32) {
    %c0_i32 = arith.constant 0 : i32
    %c0_i32_0 = arith.constant 0 : i32
    return %arg0, %c0_i32 : i32, i32
  }
  func.func @transform_7(%arg0: i32, %arg1: i32) -> (i32, i32) {
    %c0_i32 = arith.constant 0 : i32
    %c0_i32_0 = arith.constant 0 : i32
    return %arg0, %c0_i32 : i32, i32
  }
}

</mosaic_0001>

<llo_original>
// kernel: tpu_custom_call.1
$region0: #{tpu_custom_call.1}
  #allocation0 [shape = 'u32[]', space=smem, size = 0x4, offset = 0x4, fixed_abs, tag = 'smem constant byte address 0x4 - core index']
  #allocation1 [shape = 'u32[144,128]{1,0:T(1,128)}', space=vmem, size = 0x12000, scoped, tag = 'internal scratch']
  #allocation2 [shape = 'f32[8,128]{1,0:T(8,128)}', space=vmem, size = 0x1000, scoped, tag = 'scratch operand']
  #allocation3 [shape = 'f32[8,1]{1,0:T(8,128)}', space=vmem, size = 0x1000, scoped, tag = 'scratch operand']
  #allocation4 [shape = 'f32[8,1]{1,0:T(8,128)}', space=vmem, size = 0x1000, scoped, tag = 'scratch operand']
  #allocation5 [shape = 'f32[8,1]{1,0:T(8,128)}', space=vmem, size = 0x1000, scoped, tag = 'scratch operand']
  #allocation6 [shape = 'f32[8,1]{1,0:T(8,128)}', space=vmem, size = 0x1000, scoped, tag = 'scratch operand']
  #allocation7 [shape = 'f32[8,1]{1,0:T(8,128)}', space=vmem, size = 0x1000, scoped, tag = 'scratch operand']
  #allocation8 [shape = 'f32[8,1]{1,0:T(8,128)}', space=vmem, size = 0x1000, scoped, tag = 'scratch operand']
  %s0 = inlined_call_operand.hbm [shape: f32[16,256], index: 0, kind: input, shape index: {}]
  %s1 = inlined_call_operand.vmem [shape: f32[16,128], index: 1, kind: input, shape index: {}]
  %s2 = inlined_call_operand.vmem [shape: s32[16,1], index: 2, kind: input, shape index: {}]
  %s3 = inlined_call_operand.hbm [shape: f32[256,128], index: 3, kind: input, shape index: {}]
  %s4 = inlined_call_operand.vmem [shape: f32[16,128], index: 4, kind: input, shape index: {}]
  %s5 = inlined_call_operand.vmem [shape: f32[16,1], index: 5, kind: output, shape index: {0}]
  %s6 = inlined_call_operand.vmem [shape: f32[16,1], index: 6, kind: output, shape index: {1}]
  %s7 = inlined_call_operand.vmem [shape: f32[16,1], index: 7, kind: output, shape index: {2}]
  %8 = xla_tuple %s5, %s6, %s7
  %s9 = sld [smem:[#allocation0]]
  $region85: #{tpu_custom_call.1} parent=0
    _
  %s11 = ssub.s32 1, %s9
  %s12 = scalar_select 0, %s11, %s9
  $region1: #{tpu_custom_call.1} parent=0
    #allocation9 [shape = 'u8[8192]{0}', space=vmem, size = 0x2000, scoped, tag = 'input window, operand 0']
    #allocation10 [shape = 's32[2]{0}', space=sflag, size = 0x8, scoped, tag = 'scoped memory for tpu_custom_call.1']
    #allocation11 [shape = 'u8[131072]{0}', space=vmem, size = 0x20000, scoped, tag = 'input window, operand 3']
    #allocation12 [shape = 's32[2]{0}', space=sflag, size = 0x8, scoped, tag = 'scoped memory for tpu_custom_call.1']
    %13 = vsyncpa [#allocation10], 0
    %s14 = scalar_lea.sflag [#allocation10], 1
    %15 = vsyncpa %s14, 0
    %16 = vsyncpa [#allocation12], 0
    %s17 = scalar_lea.sflag [#allocation12], 1
    %18 = vsyncpa %s17, 0
    loop: start=0, step=1, limit=6
    $region2: #{tpu_custom_call.1} parent=1 // loop_pre_header
      _
    $region3: #{tpu_custom_call.1} parent=1 // loop_header
      %s20 = sphi 0, %s24
      %p21 = scmp.ge.s32.totalorder %s20, 6
      %s27 = sphi 0, %s39
      %s28 = sphi 0, %s35
      %s29 = sphi 0, %s27
      %s30 = sphi 0, %s28
      %s31 = sphi 0, %s29
      %s32 = sphi 0, %s30
      %s44 = sphi 0, %s46
      %s47 = sphi 0, %s44
      %s48 = sphi 0, %s47
      %s64 = sphi 0, %s48
      %s70 = sphi 0, %s72
      %s73 = sphi 0, %s70
      %s74 = sphi 0, %s73
      %s90 = sphi 0, %s74
      %s96 = sphi 0, %s98
      %s99 = sphi 0, %s96
      %s100 = sphi 0, %s99
      %s116 = sphi 0, %s100
      %s122 = sphi 0, %s124
      %s125 = sphi 0, %s122
      %s126 = sphi 0, %s125
      %s142 = sphi 0, %s126
      %s148 = sphi 0, %s150
      %s151 = sphi 0, %s148
      %s152 = sphi 0, %s151
      %s168 = sphi 0, %s152
      %s174 = sphi 0, %s176
      %s177 = sphi 0, %s174
      %s178 = sphi 0, %s177
      %s194 = sphi 0, %s178
      %s200 = sphi 0, %s202
      %s203 = sphi 0, %s200
      %s204 = sphi 0, %s203
      %s220 = sphi 0, %s204
      %s226 = sphi 0, %s228
      %s229 = sphi 0, %s226
      %s230 = sphi 0, %s229
      %s246 = sphi 0, %s230
    $region4: #{tpu_custom_call.1} parent=1 // loop_header_branch
      %23 = sbr.rel (%p21) target = $region8
    $region5: #{tpu_custom_call.1} parent=1 // loop_body
      %s25 = ssub.s32 %s20, 1
      %s26 = ssub.s32 %s20, 2
      %s33 = sadd.s32 1, %s28
      %p34 = scmp.ge.s32.totalorder %s33, 2
      %s35 = scalar_select %p34, 0, %s33
      %s36 = sadd.s32 1, %s27
      %s37 = scalar_select %p34, %s36, %s27
      %p38 = scmp.ge.s32.totalorder %s37, 2
      %s39 = scalar_select %p38, 0, %s37
      %s40 = ssub.s32 %s27, %s39
      %s41 = ssub.s32 %s28, %s35
      %s42 = sor.u32 %s40, %s41
      %p43 = scmp.eq.s32.totalorder %s42, 0
      %s45 = sadd.s32 %s44, 1
      %s46 = scalar_select %p43, %s44, %s45
      %p49 = pneg %p43
      %p50 = scmp.eq.s32.totalorder %s20, 3
      %p51 = por %p49, %p50
      %p52 = scmp.ne.s32.totalorder %s44, %s47
      %p53 = scmp.eq.s32.totalorder %s20, 0
      %p54 = por %p52, %p53
      %p55 = scmp.ne.s32.totalorder %s44, %s47
      %p56 = scmp.eq.s32.totalorder %s25, 3
      %p57 = por %p55, %p56
      %p58 = scmp.ne.s32.totalorder %s47, %s48
      %p59 = scmp.eq.s32.totalorder %s25, 0
      %p60 = por %p58, %p59
      %p61 = scmp.ne.s32.totalorder %s47, %s48
      %p62 = scmp.eq.s32.totalorder %s26, 3
      %p63 = por %p61, %p62
      %p65 = scmp.ne.s32.totalorder %s48, %s64
      %p66 = scmp.eq.s32.totalorder %s26, 0
      %p67 = por %p65, %p66
      %s68 = ssub.s32 %s27, %s39
      %p69 = scmp.eq.s32.totalorder %s68, 0
      %s71 = sadd.s32 %s70, 1
      %s72 = scalar_select %p69, %s70, %s71
      %p75 = pneg %p69
      %p76 = scmp.eq.s32.totalorder %s20, 3
      %p77 = por %p75, %p76
      %p78 = scmp.ne.s32.totalorder %s70, %s73
      %p79 = scmp.eq.s32.totalorder %s20, 0
      %p80 = por %p78, %p79
      %p81 = scmp.ne.s32.totalorder %s70, %s73
      %p82 = scmp.eq.s32.totalorder %s25, 3
      %p83 = por %p81, %p82
      %p84 = scmp.ne.s32.totalorder %s73, %s74
      %p85 = scmp.eq.s32.totalorder %s25, 0
      %p86 = por %p84, %p85
      %p87 = scmp.ne.s32.totalorder %s73, %s74
      %p88 = scmp.eq.s32.totalorder %s26, 3
      %p89 = por %p87, %p88
      %p91 = scmp.ne.s32.totalorder %s74, %s90
      %p92 = scmp.eq.s32.totalorder %s26, 0
      %p93 = por %p91, %p92
      %s94 = ssub.s32 %s27, %s39
      %p95 = scmp.eq.s32.totalorder %s94, 0
      %s97 = sadd.s32 %s96, 1
      %s98 = scalar_select %p95, %s96, %s97
      %p101 = pneg %p95
      %p102 = scmp.eq.s32.totalorder %s20, 3
      %p103 = por %p101, %p102
      %p104 = scmp.ne.s32.totalorder %s96, %s99
      %p105 = scmp.eq.s32.totalorder %s20, 0
      %p106 = por %p104, %p105
      %p107 = scmp.ne.s32.totalorder %s96, %s99
      %p108 = scmp.eq.s32.totalorder %s25, 3
      %p109 = por %p107, %p108
      %p110 = scmp.ne.s32.totalorder %s99, %s100
      %p111 = scmp.eq.s32.totalorder %s25, 0
      %p112 = por %p110, %p111
      %p113 = scmp.ne.s32.totalorder %s99, %s100
      %p114 = scmp.eq.s32.totalorder %s26, 3
      %p115 = por %p113, %p114
      %p117 = scmp.ne.s32.totalorder %s100, %s116
      %p118 = scmp.eq.s32.totalorder %s26, 0
      %p119 = por %p117, %p118
      %s120 = ssub.s32 %s28, %s35
      %p121 = scmp.eq.s32.totalorder %s120, 0
      %s123 = sadd.s32 %s122, 1
      %s124 = scalar_select %p121, %s122, %s123
      %p127 = pneg %p121
      %p128 = scmp.eq.s32.totalorder %s20, 3
      %p129 = por %p127, %p128
      %p130 = scmp.ne.s32.totalorder %s122, %s125
      %p131 = scmp.eq.s32.totalorder %s20, 0
      %p132 = por %p130, %p131
      %p133 = scmp.ne.s32.totalorder %s122, %s125
      %p134 = scmp.eq.s32.totalorder %s25, 3
      %p135 = por %p133, %p134
      %p136 = scmp.ne.s32.totalorder %s125, %s126
      %p137 = scmp.eq.s32.totalorder %s25, 0
      %p138 = por %p136, %p137
      %p139 = scmp.ne.s32.totalorder %s125, %s126
      %p140 = scmp.eq.s32.totalorder %s26, 3
      %p141 = por %p139, %p140
      %p143 = scmp.ne.s32.totalorder %s126, %s142
      %p144 = scmp.eq.s32.totalorder %s26, 0
      %p145 = por %p143, %p144
      %s146 = ssub.s32 %s27, %s39
      %p147 = scmp.eq.s32.totalorder %s146, 0
      %s149 = sadd.s32 %s148, 1
      %s150 = scalar_select %p147, %s148, %s149
      %p153 = pneg %p147
      %p154 = scmp.eq.s32.totalorder %s20, 3
      %p155 = por %p153, %p154
      %p156 = scmp.ne.s32.totalorder %s148, %s151
      %p157 = scmp.eq.s32.totalorder %s20, 0
      %p158 = por %p156, %p157
      %p159 = scmp.ne.s32.totalorder %s148, %s151
      %p160 = scmp.eq.s32.totalorder %s25, 3
      %p161 = por %p159, %p160
      %p162 = scmp.ne.s32.totalorder %s151, %s152
      %p163 = scmp.eq.s32.totalorder %s25, 0
      %p164 = por %p162, %p163
      %p165 = scmp.ne.s32.totalorder %s151, %s152
      %p166 = scmp.eq.s32.totalorder %s26, 3
      %p167 = por %p165, %p166
      %p169 = scmp.ne.s32.totalorder %s152, %s168
      %p170 = scmp.eq.s32.totalorder %s26, 0
      %p171 = por %p169, %p170
      %s172 = ssub.s32 %s27, %s39
      %p173 = scmp.eq.s32.totalorder %s172, 0
      %s175 = sadd.s32 %s174, 1
      %s176 = scalar_select %p173, %s174, %s175
      %p179 = pneg %p173
      %p180 = scmp.eq.s32.totalorder %s20, 3
      %p181 = por %p179, %p180
      %p182 = scmp.ne.s32.totalorder %s174, %s177
      %p183 = scmp.eq.s32.totalorder %s20, 0
      %p184 = por %p182, %p183
      %p185 = scmp.ne.s32.totalorder %s174, %s177
      %p186 = scmp.eq.s32.totalorder %s25, 3
      %p187 = por %p185, %p186
      %p188 = scmp.ne.s32.totalorder %s177, %s178
      %p189 = scmp.eq.s32.totalorder %s25, 0
      %p190 = por %p188, %p189
      %p191 = scmp.ne.s32.totalorder %s177, %s178
      %p192 = scmp.eq.s32.totalorder %s26, 3
      %p193 = por %p191, %p192
      %p195 = scmp.ne.s32.totalorder %s178, %s194
      %p196 = scmp.eq.s32.totalorder %s26, 0
      %p197 = por %p195, %p196
      %s198 = ssub.s32 %s27, %s39
      %p199 = scmp.eq.s32.totalorder %s198, 0
      %s201 = sadd.s32 %s200, 1
      %s202 = scalar_select %p199, %s200, %s201
      %p205 = pneg %p199
      %p206 = scmp.eq.s32.totalorder %s20, 3
      %p207 = por %p205, %p206
      %p208 = scmp.ne.s32.totalorder %s200, %s203
      %p209 = scmp.eq.s32.totalorder %s20, 0
      %p210 = por %p208, %p209
      %p211 = scmp.ne.s32.totalorder %s200, %s203
      %p212 = scmp.eq.s32.totalorder %s25, 3
      %p213 = por %p211, %p212
      %p214 = scmp.ne.s32.totalorder %s203, %s204
      %p215 = scmp.eq.s32.totalorder %s25, 0
      %p216 = por %p214, %p215
      %p217 = scmp.ne.s32.totalorder %s203, %s204
      %p218 = scmp.eq.s32.totalorder %s26, 3
      %p219 = por %p217, %p218
      %p221 = scmp.ne.s32.totalorder %s204, %s220
      %p222 = scmp.eq.s32.totalorder %s26, 0
      %p223 = por %p221, %p222
      %s224 = ssub.s32 %s27, %s39
      %p225 = scmp.eq.s32.totalorder %s224, 0
      %s227 = sadd.s32 %s226, 1
      %s228 = scalar_select %p225, %s226, %s227
      %p231 = pneg %p225
      %p232 = scmp.eq.s32.totalorder %s20, 3
      %p233 = por %p231, %p232
      %p234 = scmp.ne.s32.totalorder %s226, %s229
      %p235 = scmp.eq.s32.totalorder %s20, 0
      %p236 = por %p234, %p235
      %p237 = scmp.ne.s32.totalorder %s226, %s229
      %p238 = scmp.eq.s32.totalorder %s25, 3
      %p239 = por %p237, %p238
      %p240 = scmp.ne.s32.totalorder %s229, %s230
      %p241 = scmp.eq.s32.totalorder %s25, 0
      %p242 = por %p240, %p241
      %p243 = scmp.ne.s32.totalorder %s229, %s230
      %p244 = scmp.eq.s32.totalorder %s26, 3
      %p245 = por %p243, %p244
      %p247 = scmp.ne.s32.totalorder %s230, %s246
      %p248 = scmp.eq.s32.totalorder %s26, 0
      %p249 = por %p247, %p248
      %p250 = scmp.le.s32.totalorder 1, %s20
      %p251 = scmp.lt.s32.totalorder %s20, 5
      %p252 = pnand %p250, %p251
      %p253 = pneg %p252
      // Predicated region
      $region9: #{tpu_custom_call.1} parent=5 // pred_check
        _
      $region10: #{tpu_custom_call.1} parent=5 // pred_check_branch
        %255 = sbr.rel (%p252) target = $region12
      $region11: #{tpu_custom_call.1} parent=5 // pred_region
        %s256 = ssub.s32 %s20, 1
      $region12: #{tpu_custom_call.1} parent=5 // pred_fallthru
        _
      %p257 = scmp.lt.s32.totalorder %s20, 4
      // Predicated region
      $region13: #{tpu_custom_call.1} parent=5 // pred_check
        %p258 = pneg %p257
      $region14: #{tpu_custom_call.1} parent=5 // pred_check_branch
        %260 = sbr.rel (%p258) target = $region16
      $region15: #{tpu_custom_call.1} parent=5 // pred_region
        // Predicated region
        $region17: #{tpu_custom_call.1} parent=15 // pred_check
          %p261 = pneg %p54
        $region18: #{tpu_custom_call.1} parent=15 // pred_check_branch
          %263 = sbr.rel (%p261) target = $region20
        $region19: #{tpu_custom_call.1} parent=15 // pred_region
          %s264 = sand.u32 %s44, 1
          %s265 = scalar_lea.sflag [#allocation10], %s264
          %s266 = sand.u32 %s44, 1
          %s267 = smul.addr %s266, 8
          %s268 = scalar_lea.vmem [#allocation9], %s267
          %s270 = ssub.s32 128, 128
          %271 = vsyncadd %s265, %s270
          %s272 = smul.addr %s27, 2
          %s273 = sadd.s32 %s28, %s272
          %s274 = smul.addr %s273, 128
          %s275 = scalar_lea.hbm %s0, %s274
          %s277 = sshll.u32 %s268, 4
          %s278 = int_to_ptr.vmem [resolvable:$true] %s277
          %280 = dma.hbm_to_vmem [thread:$0]  %s275, 128, %s278, %s265
        $region20: #{tpu_custom_call.1} parent=15 // pred_fallthru
          _
        // Predicated region
        $region21: #{tpu_custom_call.1} parent=15 // pred_check
          %p281 = pneg %p80
        $region22: #{tpu_custom_call.1} parent=15 // pred_check_branch
          %283 = sbr.rel (%p281) target = $region24
        $region23: #{tpu_custom_call.1} parent=15 // pred_region
          %p284 = scmp.lt.s32.totalorder %s27, 1
          %s285 = scalar_select %p284, %s27, 1
          %s286 = smul.addr %s285, 8
          %s287 = scalar_lea.vmem %s1, %s286
        $region24: #{tpu_custom_call.1} parent=15 // pred_fallthru
          _
        // Predicated region
        $region25: #{tpu_custom_call.1} parent=15 // pred_check
          %p288 = pneg %p106
        $region26: #{tpu_custom_call.1} parent=15 // pred_check_branch
          %290 = sbr.rel (%p288) target = $region28
        $region27: #{tpu_custom_call.1} parent=15 // pred_region
          %p291 = scmp.lt.s32.totalorder %s27, 1
          %s292 = scalar_select %p291, %s27, 1
          %s293 = smul.addr %s292, 8
          %s294 = scalar_lea.vmem %s2, %s293
        $region28: #{tpu_custom_call.1} parent=15 // pred_fallthru
          _
        // Predicated region
        $region29: #{tpu_custom_call.1} parent=15 // pred_check
          %p295 = pneg %p132
        $region30: #{tpu_custom_call.1} parent=15 // pred_check_branch
          %297 = sbr.rel (%p295) target = $region32
        $region31: #{tpu_custom_call.1} parent=15 // pred_region
          %s298 = sand.u32 %s122, 1
          %s299 = scalar_lea.sflag [#allocation12], %s298
          %s300 = sand.u32 %s122, 1
          %s301 = smul.addr %s300, 128
          %s302 = scalar_lea.vmem [#allocation11], %s301
          %s303 = smul.u32 16, %s28
          %s305 = ssub.s32 2048, 2048
          %306 = vsyncadd %s299, %s305
          %s307 = smul.addr %s303, 128
          %s308 = scalar_lea.hbm %s3, %s307
          %s309 = sshll.u32 %s302, 4
          %s310 = int_to_ptr.vmem [resolvable:$true] %s309
          %315 = dma.hbm_to_vmem [thread:$0]  %s308, 2048, %s310, %s299, 128, 128, 8
        $region32: #{tpu_custom_call.1} parent=15 // pred_fallthru
          _
        // Predicated region
        $region33: #{tpu_custom_call.1} parent=15 // pred_check
          %p316 = pneg %p158
        $region34: #{tpu_custom_call.1} parent=15 // pred_check_branch
          %318 = sbr.rel (%p316) target = $region36
        $region35: #{tpu_custom_call.1} parent=15 // pred_region
          %p319 = scmp.lt.s32.totalorder %s27, 1
          %s320 = scalar_select %p319, %s27, 1
          %s321 = smul.addr %s320, 8
          %s322 = scalar_lea.vmem %s4, %s321
        $region36: #{tpu_custom_call.1} parent=15 // pred_fallthru
          _
      $region16: #{tpu_custom_call.1} parent=5 // pred_fallthru
        _
      %p323 = scmp.le.s32.totalorder 1, %s20
      %p324 = scmp.lt.s32.totalorder %s20, 5
      %p325 = pnand %p323, %p324
      %p326 = pneg %p325
      // Predicated region
      $region37: #{tpu_custom_call.1} parent=5 // pred_check
        _
      $region38: #{tpu_custom_call.1} parent=5 // pred_check_branch
        %328 = sbr.rel (%p325) target = $region40
      $region39: #{tpu_custom_call.1} parent=5 // pred_region
        %s329 = ssub.s32 %s20, 1
        %s330 = sand.u32 %s47, 1
        %s331 = scalar_lea.sflag [#allocation10], %s330
        %s332 = sand.u32 %s47, 1
        %s333 = smul.addr %s332, 8
        %s334 = scalar_lea.vmem [#allocation9], %s333
        // Predicated region
        $region41: #{tpu_custom_call.1} parent=39 // pred_check
          %p335 = pneg %p60
        $region42: #{tpu_custom_call.1} parent=39 // pred_check_branch
          %337 = sbr.rel (%p335) target = $region44
        $region43: #{tpu_custom_call.1} parent=39 // pred_region
          %338 = dma.done %s331, 128
        $region44: #{tpu_custom_call.1} parent=39 // pred_fallthru
          _
        %s339 = sand.u32 %s125, 1
        %s340 = scalar_lea.sflag [#allocation12], %s339
        %s341 = sand.u32 %s125, 1
        %s342 = smul.addr %s341, 128
        %s343 = scalar_lea.vmem [#allocation11], %s342
        // Predicated region
        $region45: #{tpu_custom_call.1} parent=39 // pred_check
          %p344 = pneg %p138
        $region46: #{tpu_custom_call.1} parent=39 // pred_check_branch
          %346 = sbr.rel (%p344) target = $region48
        $region47: #{tpu_custom_call.1} parent=39 // pred_region
          %347 = dma.done %s340, 2048
        $region48: #{tpu_custom_call.1} parent=39 // pred_fallthru
          _
        %s348 = sand.u32 %s47, 1
        %s349 = scalar_lea.sflag [#allocation10], %s348
        %s350 = sand.u32 %s47, 1
        %s351 = smul.addr %s350, 8
        %s352 = scalar_lea.vmem [#allocation9], %s351
        %p353 = pneg %p60
        %p354 = pneg %p57
        %p355 = scmp.lt.s32.totalorder %s29, 1
        %s356 = scalar_select %p355, %s29, 1
        %s357 = smul.addr %s356, 8
        %s358 = scalar_lea.vmem %s1, %s357
        %p359 = pneg %p86
        %p360 = pneg %p83
        %p361 = scmp.lt.s32.totalorder %s29, 1
        %s362 = scalar_select %p361, %s29, 1
        %s363 = smul.addr %s362, 8
        %s364 = scalar_lea.vmem %s2, %s363
        %p365 = pneg %p112
        %p366 = pneg %p109
        %s367 = sand.u32 %s125, 1
        %s368 = scalar_lea.sflag [#allocation12], %s367
        %s369 = sand.u32 %s125, 1
        %s370 = smul.addr %s369, 128
        %s371 = scalar_lea.vmem [#allocation11], %s370
        %p372 = pneg %p138
        %p373 = pneg %p135
        %p374 = scmp.lt.s32.totalorder %s29, 1
        %s375 = scalar_select %p374, %s29, 1
        %s376 = smul.addr %s375, 8
        %s377 = scalar_lea.vmem %s4, %s376
        %p378 = pneg %p164
        %p379 = pneg %p161
        %p380 = pneg %p190
        %p381 = pneg %p187
        %p382 = scmp.lt.s32.totalorder %s29, 1
        %s383 = scalar_select %p382, %s29, 1
        %s384 = smul.addr %s383, 8
        %s385 = scalar_lea.vmem %s5, %s384
        %p386 = pneg %p216
        %p387 = pneg %p213
        %p388 = scmp.lt.s32.totalorder %s29, 1
        %s389 = scalar_select %p388, %s29, 1
        %s390 = smul.addr %s389, 8
        %s391 = scalar_lea.vmem %s6, %s390
        %p392 = pneg %p242
        %p393 = pneg %p239
        %p394 = scmp.lt.s32.totalorder %s29, 1
        %s395 = scalar_select %p394, %s29, 1
        %s396 = smul.addr %s395, 8
        %s397 = scalar_lea.vmem %s7, %s396
        %p398 = scmp.lt.s32.totalorder %s29, 1
        %s399 = scalar_select %p398, %s29, 1
        %s400 = smul.addr %s399, 8
        %s401 = scalar_lea.vmem %s1, %s400
        %p402 = scmp.lt.s32.totalorder %s29, 1
        %s403 = scalar_select %p402, %s29, 1
        %s404 = smul.addr %s403, 8
        %s405 = scalar_lea.vmem %s2, %s404
        %s406 = smul.u32 16, %s30
        %p407 = scmp.lt.s32.totalorder %s29, 1
        %s408 = scalar_select %p407, %s29, 1
        %s409 = smul.addr %s408, 8
        %s410 = scalar_lea.vmem %s4, %s409
        %p411 = scmp.lt.s32.totalorder %s29, 1
        %s412 = scalar_select %p411, %s29, 1
        %s413 = smul.addr %s412, 8
        %s414 = scalar_lea.vmem %s5, %s413
        %p415 = scmp.lt.s32.totalorder %s29, 1
        %s416 = scalar_select %p415, %s29, 1
        %s417 = smul.addr %s416, 8
        %s418 = scalar_lea.vmem %s6, %s417
        %p419 = scmp.lt.s32.totalorder %s29, 1
        %s420 = scalar_select %p419, %s29, 1
        %s421 = smul.addr %s420, 8
        %s422 = scalar_lea.vmem %s7, %s421
        %v423 = vld [vmem:[%s405] sm:$0xff]
        %p424 = scmp.eq.s32.totalorder %s30, 0
        // Predicated region
        $region49: #{tpu_custom_call.1} parent=39 // pred_check
          %p425 = pneg %p424
        $region50: #{tpu_custom_call.1} parent=39 // pred_check_branch
          %427 = sbr.rel (%p425) target = $region52
        $region51: #{tpu_custom_call.1} parent=39 // pred_region
          %v428 = vld [vmem:[%s401] sm:$0xff]
          %v429 = vmul.f32 %v428, %v428
          %430 = vadd.xlane.f32.xlu0 %v429
          %v431 = vpop.xlane.xlu0 %430
          %v432 = vadd.f32 %v431, 1e-12
          %v433 = vrsqrt.pop %v432
          %v434 = vmul.f32 %v428, %v433
          %435 = vst [vmem:[#allocation2] sm:$0xff] %v434
          %v436 = vld [vmem:[%s410] sm:$0xff]
          %v437 = vsub.f32 %v428, %v436
          %v438 = vmul.f32 %v437, %v437
          %439 = vadd.xlane.f32.xlu0 %v438
          %v440 = vpop.xlane.xlu0 %439
          %v441 = vmul.f32 %v440, 0.0015
          %vm442 = vcmask 7168
          %443 = vst.msk [vmem:[%s418] sm:$0xff] %vm442, %v441
          %444 = vst.msk [vmem:[#allocation3] sm:$0xff] %vm442, -inf
          %445 = vst.msk [vmem:[#allocation6] sm:$0xff] %vm442, -inf
          %446 = vst.msk [vmem:[#allocation4] sm:$0xff] %vm442, 0.0
          %447 = vst.msk [vmem:[#allocation5] sm:$0xff] %vm442, 0.0
          %448 = vst.msk [vmem:[#allocation7] sm:$0xff] %vm442, 0.0
          %449 = vst.msk [vmem:[#allocation8] sm:$0xff] %vm442, 0.0
        $region52: #{tpu_custom_call.1} parent=39 // pred_fallthru
          _
        %s450 = smul.u32 %s30, 128
        %v451 = vlaneseq
        %v452 = vand.u32 %v451, 127
        %v453 = vstv %s450
        %v454 = vadd.s32 %v453, %v452
        %455 = vset.pattern.permute.xlu0 0
        %456 = vperm.xlu0 %455, %v423
        %v457 = vpop.permute.xlu0 %456
        %vm458 = vcmp.eq.s32.totalorder %v454, %v457
        %v459 = vld [vmem:[%s343] sm:$0xff]
        %v460 = vld [vmem:[%s343 + $0x8] sm:$0xff]
        %v461 = vld [vmem:[%s343 + $0x10] sm:$0xff]
        %v462 = vld [vmem:[%s343 + $0x18] sm:$0xff]
        %v463 = vld [vmem:[%s343 + $0x20] sm:$0xff]
        %v464 = vld [vmem:[%s343 + $0x28] sm:$0xff]
        %v465 = vld [vmem:[%s343 + $0x30] sm:$0xff]
        %v466 = vld [vmem:[%s343 + $0x38] sm:$0xff]
        %v467 = vld [vmem:[%s343 + $0x40] sm:$0xff]
        %v468 = vld [vmem:[%s343 + $0x48] sm:$0xff]
        %v469 = vld [vmem:[%s343 + $0x50] sm:$0xff]
        %v470 = vld [vmem:[%s343 + $0x58] sm:$0xff]
        %v471 = vld [vmem:[%s343 + $0x60] sm:$0xff]
        %v472 = vld [vmem:[%s343 + $0x68] sm:$0xff]
        %v473 = vld [vmem:[%s343 + $0x70] sm:$0xff]
        %v474 = vld [vmem:[%s343 + $0x78] sm:$0xff]
        %v475 = vld [vmem:[#allocation2] sm:$0xff]
        %476 = vmatprep.subr.mxu0 0.0
        %477 = vmatpush1.xpose.msra.mxu0 %v459
        %478 = vmatprep.subr.mxu0 0.0
        %479 = vmatpush1.xpose.msra.mxu0 %v460
        %480 = vmatprep.subr.mxu0 0.0
        %481 = vmatpush1.xpose.msra.mxu0 %v461
        %482 = vmatprep.subr.mxu0 0.0
        %483 = vmatpush1.xpose.msra.mxu0 %v462
        %484 = vmatprep.subr.mxu0 0.0
        %485 = vmatpush1.xpose.msra.mxu0 %v463
        %486 = vmatprep.subr.mxu0 0.0
        %487 = vmatpush1.xpose.msra.mxu0 %v464
        %488 = vmatprep.subr.mxu0 0.0
        %489 = vmatpush1.xpose.msra.mxu0 %v465
        %490 = vmatprep.subr.mxu0 0.0
        %491 = vmatpush1.xpose.msra.mxu0 %v466
        %492 = vmatprep.subr.mxu0 0.0
        %493 = vmatpush1.xpose.msra.mxu0 %v467
        %494 = vmatprep.subr.mxu0 0.0
        %495 = vmatpush1.xpose.msra.mxu0 %v468
        %496 = vmatprep.subr.mxu0 0.0
        %497 = vmatpush1.xpose.msra.mxu0 %v469
        %498 = vmatprep.subr.mxu0 0.0
        %499 = vmatpush1.xpose.msra.mxu0 %v470
        %500 = vmatprep.subr.mxu0 0.0
        %501 = vmatpush1.xpose.msra.mxu0 %v471
        %502 = vmatprep.subr.mxu0 0.0
        %503 = vmatpush1.xpose.msra.mxu0 %v472
        %504 = vmatprep.subr.mxu0 0.0
        %505 = vmatpush1.xpose.msra.mxu0 %v473
        %506 = vmatprep.subr.mxu0 0.0
        %507 = vmatpush1.xpose.msra.mxu0 %v474
        %508 = vmatprep.subr.mxu0 0.0
        %509 = vmatpush1.xpose.msra.mxu0 0.0
        %510 = vmatprep.subr.mxu0 0.0
        %511 = vmatpush1.xpose.msra.mxu0 0.0
        %512 = vmatprep.subr.mxu0 0.0
        %513 = vmatpush1.xpose.msra.mxu0 0.0
        %514 = vmatprep.subr.mxu0 0.0
        %515 = vmatpush1.xpose.msra.mxu0 0.0
        %516 = vmatprep.subr.mxu0 0.0
        %517 = vmatpush1.xpose.msra.mxu0 0.0
        %518 = vmatprep.subr.mxu0 0.0
        %519 = vmatpush1.xpose.msra.mxu0 0.0
        %520 = vmatprep.subr.mxu0 0.0
        %521 = vmatpush1.xpose.msra.mxu0 0.0
        %522 = vmatprep.subr.mxu0 0.0
        %523 = vmatpush1.xpose.msra.mxu0 0.0
        %524 = vmatprep.subr.mxu0 0.0
        %525 = vmatpush1.xpose.msra.mxu0 0.0
        %526 = vmatprep.subr.mxu0 0.0
        %527 = vmatpush1.xpose.msra.mxu0 0.0
        %528 = vmatprep.subr.mxu0 0.0
        %529 = vmatpush1.xpose.msra.mxu0 0.0
        %530 = vmatprep.subr.mxu0 0.0
        %531 = vmatpush1.xpose.msra.mxu0 0.0
        %532 = vmatprep.subr.mxu0 0.0
        %533 = vmatpush1.xpose.msra.mxu0 0.0
        %534 = vmatprep.subr.mxu0 0.0
        %535 = vmatpush1.xpose.msra.mxu0 0.0
        %536 = vmatprep.subr.mxu0 0.0
        %537 = vmatpush1.xpose.msra.mxu0 0.0
        %538 = vmatprep.subr.mxu0 0.0
        %539 = vmatpush1.xpose.msra.mxu0 0.0
        %540 = vmatprep.mubr.f32.mxu0 0.0
        %541 = vmatmul.mubr.f32.gmra.mrb[0].mxu0 %v475
        %v542 = vpop.f32.mrb[0].mxu0
        %v543 = vadd.f32 0.0, %v542
        %v544 = vpop.f32.mrb[0].mxu0
        %545 = vdwg.mxu0
        %v546 = vmax.f32 %v543, -0.9999999
        %v547 = vmin.f32 %v546, 0.9999999
        %v548 = vsel %vm458, %v547, 0.0
        %549 = vadd.xlane.f32.xlu0 %v548
        %v550 = vpop.xlane.xlu0 %549
        %v551 = vmul.f32 %v550, 0.87758255
        %v552 = vmul.f32 %v550, %v550
        %v553 = vsub.f32 1.0, %v552
        %v554 = vmax.f32 %v553, 0.0
        %v555 = vrsqrt.pop %v554
        %v556 = vmul.f32 %v554, %v555
        %vm557 = vcmp.eq.f32.partialorder %v554, inf
        %v558 = vsel %vm557, %v554, %v556
        %vm559 = vcmp.eq.f32.partialorder %v554, 0.0
        %v560 = vand.u32 %v554, 2147483648
        %v561 = vsel %vm559, %v560, %v558
        %v562 = vmul.f32 %v561, 0.47942555
        %v563 = vsub.f32 %v551, %v562
        %v564 = vsub.f32 %v563, %v550
        %v565 = vmul.f32 %v564, 64.0
        %v566 = vmul.f32 %v547, 64.0
        %v567 = vsel %vm458, %v565, 0.0
        %v568 = vadd.f32 %v566, %v567
        %569 = vmax.xlane.f32.xlu0 %v568
        %v570 = vpop.xlane.xlu0 %569
        %v571 = vld [vmem:[#allocation3] sm:$0xff]
        %v572 = vmax.f32 %v571, %v570
        %v573 = vld [vmem:[#allocation4] sm:$0xff]
        %v574 = vsub.f32 %v571, %v572
        %v575 = vmul.f32 %v574, 1.442695
        %v576 = vpow.pop %v575
        %v577 = vmul.f32 %v573, %v576
        %579 = vset.pattern.permute.xlu0 0
        %580 = vperm.xlu0 %579, %v572
        %v581 = vpop.permute.xlu0 %580
        %v583 = vsub.f32 %v568, %v581
        %v584 = vmul.f32 %v583, 1.442695
        %v585 = vpow.pop %v584
        %586 = vadd.xlane.f32.xlu0 %v585
        %v587 = vpop.xlane.xlu0 %586
        %v588 = vadd.f32 %v577, %v587
        %vm589 = vcmask 7168
        %590 = vst.msk [vmem:[#allocation4] sm:$0xff] %vm589, %v588
        %591 = vst.msk [vmem:[#allocation3] sm:$0xff] %vm589, %v572
        %v592 = vld [vmem:[#allocation5] sm:$0xff]
        %v593 = vsel %vm458, %v568, 0.0
        %594 = vadd.xlane.f32.xlu0 %v593
        %v595 = vpop.xlane.xlu0 %594
        %v596 = vadd.f32 %v592, %v595
        %597 = vst.msk [vmem:[#allocation5] sm:$0xff] %vm589, %v596
        %v598 = vld [vmem:[%s334] sm:$0xff]
        %599 = vmax.xlane.f32.xlu0 %v598
        %v600 = vpop.xlane.xlu0 %599
        %v601 = vld [vmem:[#allocation6] sm:$0xff]
        %v602 = vmax.f32 %v601, %v600
        %v603 = vld [vmem:[#allocation7] sm:$0xff]
        %v604 = vsub.f32 %v601, %v602
        %v605 = vmul.f32 %v604, 1.442695
        %v606 = vpow.pop %v605
        %v607 = vmul.f32 %v603, %v606
        %609 = vset.pattern.permute.xlu0 0
        %610 = vperm.xlu0 %609, %v602
        %v611 = vpop.permute.xlu0 %610
        %v613 = vsub.f32 %v598, %v611
        %v614 = vmul.f32 %v613, 1.442695
        %v615 = vpow.pop %v614
        %616 = vadd.xlane.f32.xlu0 %v615
        %v617 = vpop.xlane.xlu0 %616
        %v618 = vadd.f32 %v607, %v617
        %619 = vst.msk [vmem:[#allocation7] sm:$0xff] %vm589, %v618
        %620 = vst.msk [vmem:[#allocation6] sm:$0xff] %vm589, %v602
        %v621 = vld [vmem:[#allocation8] sm:$0xff]
        %v622 = vsel %vm458, %v598, 0.0
        %623 = vadd.xlane.f32.xlu0 %v622
        %v624 = vpop.xlane.xlu0 %623
        %v625 = vadd.f32 %v621, %v624
        %626 = vst.msk [vmem:[#allocation8] sm:$0xff] %vm589, %v625
        %p627 = scmp.eq.s32.totalorder %s30, 1
        // Predicated region
        $region53: #{tpu_custom_call.1} parent=39 // pred_check
          %p628 = pneg %p627
        $region54: #{tpu_custom_call.1} parent=39 // pred_check_branch
          %630 = sbr.rel (%p628) target = $region56
        $region55: #{tpu_custom_call.1} parent=39 // pred_region
          %v631 = vld [vmem:[#allocation3] sm:$0xff]
          %v632 = vld [vmem:[#allocation4] sm:$0xff]
          %v633 = vlog2.pop %v632
          %v634 = vmul.f32 %v633, 0.6931472
          %v635 = vadd.f32 %v631, %v634
          %v636 = vld [vmem:[#allocation5] sm:$0xff]
          %v637 = vsub.f32 %v635, %v636
          %638 = vst.msk [vmem:[%s414] sm:$0xff] %vm589, %v637
          %v639 = vld [vmem:[#allocation6] sm:$0xff]
          %v640 = vld [vmem:[#allocation7] sm:$0xff]
          %v641 = vlog2.pop %v640
          %v642 = vmul.f32 %v641, 0.6931472
          %v643 = vadd.f32 %v639, %v642
          %v644 = vld [vmem:[#allocation8] sm:$0xff]
          %v645 = vsub.f32 %v644, %v643
          %v646 = vmul.f32 %v645, 1.442695
          %v647 = vpow.pop %v646
          %vm648 = vcmp.gt.s32.totalorder %v423, 0
          %v649 = vsel %vm648, 0.75, 0.25
          %v650 = vsub.f32 1.0, %v647
          %v651 = vmax.f32 %v650, 1e-12
          %v652 = vlog2.pop %v651
          %v653 = vmul.f32 %v652, 0.6931472
          %v654 = vmul.f32 %v653, 2.0
          %v655 = vmul.f32 %v654, 1.442695
          %v656 = vpow.pop %v655
          %v657 = vsub.f32 0.0, %v649
          %v658 = vmul.f32 %v657, %v656
          %v659 = vmul.f32 %v658, %v645
          %660 = vst.msk [vmem:[%s422] sm:$0xff] %vm589, %v659
        $region56: #{tpu_custom_call.1} parent=39 // pred_fallthru
          _
        %p661 = scmp.lt.s32.totalorder %s29, 1
        %s662 = scalar_select %p661, %s29, 1
        %s663 = smul.addr %s662, 8
        %s664 = scalar_lea.vmem %s5, %s663
        %p665 = scmp.lt.s32.totalorder %s29, 1
        %s666 = scalar_select %p665, %s29, 1
        %s667 = smul.addr %s666, 8
        %s668 = scalar_lea.vmem %s6, %s667
        %p669 = scmp.lt.s32.totalorder %s29, 1
        %s670 = scalar_select %p669, %s29, 1
        %s671 = smul.addr %s670, 8
        %s672 = scalar_lea.vmem %s7, %s671
        // Predicated region
        $region57: #{tpu_custom_call.1} parent=39 // pred_check
          %p673 = pneg %p187
        $region58: #{tpu_custom_call.1} parent=39 // pred_check_branch
          %675 = sbr.rel (%p673) target = $region60
        $region59: #{tpu_custom_call.1} parent=39 // pred_region
          _
        $region60: #{tpu_custom_call.1} parent=39 // pred_fallthru
          _
        // Predicated region
        $region61: #{tpu_custom_call.1} parent=39 // pred_check
          %p676 = pneg %p213
        $region62: #{tpu_custom_call.1} parent=39 // pred_check_branch
          %678 = sbr.rel (%p676) target = $region64
        $region63: #{tpu_custom_call.1} parent=39 // pred_region
          _
        $region64: #{tpu_custom_call.1} parent=39 // pred_fallthru
          _
        // Predicated region
        $region65: #{tpu_custom_call.1} parent=39 // pred_check
          %p679 = pneg %p239
        $region66: #{tpu_custom_call.1} parent=39 // pred_check_branch
          %681 = sbr.rel (%p679) target = $region68
        $region67: #{tpu_custom_call.1} parent=39 // pred_region
          _
        $region68: #{tpu_custom_call.1} parent=39 // pred_fallthru
          _
      $region40: #{tpu_custom_call.1} parent=5 // pred_fallthru
        _
      %p682 = scmp.le.s32.totalorder 2, %s20
      // Predicated region
      $region69: #{tpu_custom_call.1} parent=5 // pred_check
        %p683 = pneg %p682
      $region70: #{tpu_custom_call.1} parent=5 // pred_check_branch
        %685 = sbr.rel (%p683) target = $region72
      $region71: #{tpu_custom_call.1} parent=5 // pred_region
        %s686 = ssub.s32 %s20, 2
        // Predicated region
        $region73: #{tpu_custom_call.1} parent=71 // pred_check
          %p687 = pneg %p193
        $region74: #{tpu_custom_call.1} parent=71 // pred_check_branch
          %689 = sbr.rel (%p687) target = $region76
        $region75: #{tpu_custom_call.1} parent=71 // pred_region
          %p690 = scmp.lt.s32.totalorder %s31, 1
          %s691 = scalar_select %p690, %s31, 1
          %s692 = smul.addr %s691, 8
          %s693 = scalar_lea.vmem %s5, %s692
        $region76: #{tpu_custom_call.1} parent=71 // pred_fallthru
          _
        // Predicated region
        $region77: #{tpu_custom_call.1} parent=71 // pred_check
          %p694 = pneg %p219
        $region78: #{tpu_custom_call.1} parent=71 // pred_check_branch
          %696 = sbr.rel (%p694) target = $region80
        $region79: #{tpu_custom_call.1} parent=71 // pred_region
          %p697 = scmp.lt.s32.totalorder %s31, 1
          %s698 = scalar_select %p697, %s31, 1
          %s699 = smul.addr %s698, 8
          %s700 = scalar_lea.vmem %s6, %s699
        $region80: #{tpu_custom_call.1} parent=71 // pred_fallthru
          _
        // Predicated region
        $region81: #{tpu_custom_call.1} parent=71 // pred_check
          %p701 = pneg %p245
        $region82: #{tpu_custom_call.1} parent=71 // pred_check_branch
          %703 = sbr.rel (%p701) target = $region84
        $region83: #{tpu_custom_call.1} parent=71 // pred_region
          %p704 = scmp.lt.s32.totalorder %s31, 1
          %s705 = scalar_select %p704, %s31, 1
          %s706 = smul.addr %s705, 8
          %s707 = scalar_lea.vmem %s7, %s706
        $region84: #{tpu_custom_call.1} parent=71 // pred_fallthru
          _
      $region72: #{tpu_custom_call.1} parent=5 // pred_fallthru
        _
    $region6: #{tpu_custom_call.1} parent=1 // loop_footer
      %s24 = sadd.s32 1, %s20
    $region7: #{tpu_custom_call.1} parent=1 // loop_footer_branch
      %19 = sbr.rel target = $region3
    $region8: #{tpu_custom_call.1} parent=1 // loop_exit
      _
    %708 = vsyncpa [#allocation10], 1
    %s709 = scalar_lea.sflag [#allocation10], 1
    %710 = vsyncpa %s709, 1
    %711 = vsyncpa [#allocation12], 1
    %s712 = scalar_lea.sflag [#allocation12], 1
    %713 = vsyncpa %s712, 1

</llo_original>
